<compile_context>
chip_gen: v6e
topology: v6e:2x2x1
jax: 0.10.0
libtpu: 0.0.40
codegen_flags: <defaults>
</compile_context>

<pallas_src>
import functools
import math

import jax
import jax.numpy as jnp
from jax import lax
from jax.experimental import pallas as pl
from jax.experimental.pallas import tpu as pltpu


def _round_up(n, m):
    return ((n + m - 1) // m) * m


# ----------------------------------------------------------------------------
# Parameter init (PyTorch-style uniform(-1/sqrt(fan_in), 1/sqrt(fan_in)))
# ----------------------------------------------------------------------------
def init_params(key, num_blocks, history_len, hidden_dim, num_filters, num_ops):
    params = {"convs": []}
    in_ch = history_len
    keys = jax.random.split(key, 2 * len(num_filters) + 6)
    ki = 0
    for out_ch in num_filters:
        bound = 1.0 / math.sqrt(in_ch * 3)
        w = jax.random.uniform(keys[ki], (out_ch, in_ch, 3), jnp.float32, -bound, bound)
        b = jax.random.uniform(keys[ki + 1], (out_ch,), jnp.float32, -bound, bound)
        params["convs"].append((w, b))
        in_ch = out_ch
        ki += 2

    l = num_blocks
    for _ in num_filters:
        l = math.ceil(l / 2)
    flatten_dim = num_filters[-1] * l

    def linear(kw, kb, n_out, n_in):
        bound = 1.0 / math.sqrt(n_in)
        w = jax.random.uniform(kw, (n_out, n_in), jnp.float32, -bound, bound)
        b = jax.random.uniform(kb, (n_out,), jnp.float32, -bound, bound)
        return w, b

    params["wp"], params["bp"] = linear(keys[ki], keys[ki + 1],
                                        num_blocks * num_ops, flatten_dim)
    params["wv1"], params["bv1"] = linear(keys[ki + 2], keys[ki + 3],
                                          hidden_dim, flatten_dim)
    params["wv2"], params["bv2"] = linear(keys[ki + 4], keys[ki + 5],
                                          1, hidden_dim)
    params["flatten_dim"] = flatten_dim
    return params


# ----------------------------------------------------------------------------
# One-time parameter fusion / padding (hoisted out of the forward path)
# ----------------------------------------------------------------------------
def conv1d_as_matrix(w, l_in):
    """Expand Conv1d(C_in, C_out, k=3, padding=1, stride=2) weights into a dense
    matrix M such that x.reshape(B, C_in*L_in) @ M == conv(x).reshape(B, -1)
    (channel-major / NCL flatten order)."""
    c_out, c_in, k = w.shape
    l_out = (l_in - 1) // 2 + 1          # == ceil(l_in/2) for k=3, pad=1, stride=2
    m = jnp.zeros((c_in * l_in, c_out * l_out), dtype=jnp.float32)
    rows_base = jnp.arange(c_in) * l_in
    cols_base = jnp.arange(c_out) * l_out
    for kk in range(k):
        for j in range(l_out):
            i = 2 * j + kk - 1
            if 0 <= i < l_in:
                m = m.at[(rows_base + i)[:, None], (cols_base + j)[None, :]].set(
                    w[:, :, kk].T)
    return m, l_out


def prepare_fused_params(params, num_blocks, history_len, num_ops,
                         param_dtype=jnp.bfloat16):
    """Build the lane-dense, fused operands consumed by the Pallas kernel.
    Run once at setup time."""
    # --- conv stack -> dense GEMMs (channel-major flatten layout) ---
    l_in = num_blocks
    mats, bias_rows = [], []
    for (w, b) in params["convs"]:
        m, l_out = conv1d_as_matrix(w, l_in)
        mats.append(m)
        bias_rows.append(jnp.repeat(b, l_out))       # channel-major bias
        l_in = l_out

    hidden_dim = params["wv1"].shape[0]
    n_policy = num_blocks * num_ops
    n_heads = n_policy + hidden_dim
    n_convs = len(mats)
    k_in = history_len * num_blocks

    # --- fuse policy head + value first Linear into one GEMM ---
    w_heads = jnp.concatenate([params["wp"].T, params["wv1"].T], axis=1)
    b_heads = jnp.concatenate([params["bp"], params["bv1"]])

    # --- lane-dense widths (multiples of 128); no sentinel growth ---
    dims = [k_in] + [m.shape[1] for m in mats] + [n_heads]
    D = max(128, _round_up(max(dims), 128))          # internal GEMM width
    D_in = max(128, _round_up(k_in, 128))            # activation input width
    D_out = max(128, _round_up(n_policy + 1, 128))   # output width (policy + value lane)

    def pad_mat(m):
        return jnp.zeros((D, D), jnp.float32).at[: m.shape[0], : m.shape[1]].set(m)

    w_stack = jnp.stack([pad_mat(m) for m in mats] + [pad_mat(w_heads)]
                        ).astype(param_dtype)        # (n_convs+1, D, D)

    # aux rows: [0..n_convs-1] conv biases, [n_convs] head bias,
    # [n_convs+1] wv2 aligned with the value-hidden lanes,
    # [n_convs+2, 0] bv2 scalar (added after the lane-reduce).
    n_aux = _round_up(n_convs + 3, 8)
    aux = jnp.zeros((n_aux, D), jnp.float32)
    for i, br in enumerate(bias_rows):
        aux = aux.at[i, : br.shape[0]].set(br)
    aux = aux.at[n_convs, :n_heads].set(b_heads)
    aux = aux.at[n_convs + 1, n_policy:n_heads].set(params["wv2"][0])
    aux = aux.at[n_convs + 2, 0].set(params["bv2"][0])

    return {
        "w": w_stack,                     # (n_convs+1, D, D) param_dtype
        "aux": aux,                       # (n_aux, D)        f32
        "D": D, "D_in": D_in, "D_out": D_out,
        "k_in": k_in, "n_policy": n_policy, "n_convs": n_convs,
    }


# ----------------------------------------------------------------------------
# Pallas kernel: conv stack (as GEMMs) + fused policy/value heads
# ----------------------------------------------------------------------------
def fused_forward_kernel(x_ref, w_ref, aux_ref, out_ref, *, n_policy, d_in, d_out):
    f32 = jnp.float32
    wdt = w_ref.dtype                    # bf16 weights -> bf16 MXU, f32 accumulate
    aux = aux_ref[...]                   # (n_aux, D) f32 biases / wv2 / bv2

    n_convs = w_ref.shape[0] - 1
    D = w_ref.shape[-1]

    # Conv stack (pre-expanded dense GEMMs) + ReLU. Activations arrive as bf16;
    # elementwise math stays in f32 (v5e-friendly).
    h = x_ref[...]                                            # (TB, D_in) bf16
    for layer in range(n_convs):
        w = w_ref[layer]
        if layer == 0 and d_in < D:
            w = w[:d_in, :]                                   # rectangular first GEMM
        z = jnp.dot(h, w, preferred_element_type=f32) + aux[layer:layer + 1]
        h = jnp.maximum(z, 0.0).astype(wdt)

    # Fused heads GEMM: lanes [0:n_policy] = policy logits, then value hidden.
    hh = jnp.dot(h, w_ref[n_convs], preferred_element_type=f32) \
        + aux[n_convs:n_convs + 1]

    # Value head: ReLU, lane-reduce against wv2 (zero outside the value-hidden
    # lanes), scalar bv2 add, tanh.
    vh = jnp.maximum(hh, 0.0)
    v = jnp.tanh(
        jnp.sum(vh * aux[n_convs + 1:n_convs + 2], axis=-1, keepdims=True)
        + aux[n_convs + 2:n_convs + 3, 0:1])                  # (TB, 1)

    # Lane-dense output: policy logits in [0:n_policy]; tanh(value) overwrites
    # lane n_policy (single column store; no iota/where masking).
    out_ref[...] = hh[:, :d_out] if d_out < D else hh
    out_ref[:, n_policy:n_policy + 1] = v


# ----------------------------------------------------------------------------
# Forward wrapper (per-call path: pad x, one pallas_call, slice outputs)
# ----------------------------------------------------------------------------
def prune_model_forward(fused, x, num_blocks, num_ops):
    """x: (B, T, N) float32 -> (policy_logits (B, N, num_ops), value (B,))"""
    B, T, N = x.shape
    D, D_in, D_out = fused["D"], fused["D_in"], fused["D_out"]
    k_in = fused["k_in"]
    n_policy = fused["n_policy"]
    n_mats = fused["w"].shape[0]
    n_aux = fused["aux"].shape[0]

    # Batch tile: >=16 sublanes (bf16 packs 16 rows/vreg); pick >=2 grid steps
    # once the batch is big enough so v7x's second TensorCore gets work via the
    # "parallel" grid axis; cap at 256 so (TB, D) f32 temporaries don't spill.
    B16 = _round_up(B, 16)
    if B16 <= 16:
        TB = 16
    else:
        TB = min(256, _round_up((B16 + 1) // 2, 16))
    B_pad = _round_up(B, TB)

    # Channel-major (NCL) flatten, zero-pad to (B_pad, D_in), bf16 activations
    # (padding columns must stay exactly zero).
    x_flat = x.reshape(B, T * N).astype(jnp.float32)
    x_pad = jnp.pad(x_flat, ((0, B_pad - B), (0, D_in - k_in))).astype(jnp.bfloat16)

    kernel = functools.partial(fused_forward_kernel, n_policy=n_policy,
                               d_in=D_in, d_out=D_out)

    # Explicit VMEM budget: weights + aux (double-buffered by the default
    # pipeliner), bf16/f32 I/O tiles, plus temporary headroom.
    w_bytes = int(fused["w"].size) * fused["w"].dtype.itemsize
    aux_bytes = int(fused["aux"].size) * 4
    io_bytes = 2 * TB * D_in * 2 + 2 * TB * D_out * 4
    tmp_bytes = 6 * TB * D * 4
    vmem_needed = 2 * (w_bytes + aux_bytes) + io_bytes + tmp_bytes
    vmem_limit = int(min(64 * 2**20, max(16 * 2**20, 2 * vmem_needed)))

    flops = 2 * B_pad * D * (D_in + (n_mats - 1) * D)
    bytes_accessed = w_bytes + aux_bytes + B_pad * D_in * 2 + B_pad * D_out * 4

    out = pl.pallas_call(
        kernel,
        out_shape=jax.ShapeDtypeStruct((B_pad, D_out), jnp.float32),
        grid_spec=pltpu.PrefetchScalarGridSpec(
            num_scalar_prefetch=0,
            grid=(B_pad // TB,),
            in_specs=[
                pl.BlockSpec((TB, D_in), lambda b: (b, 0)),          # activations
                pl.BlockSpec((n_mats, D, D), lambda b: (0, 0, 0)),   # weights (resident)
                pl.BlockSpec((n_aux, D), lambda b: (0, 0)),          # biases/wv2/bv2
            ],
            out_specs=pl.BlockSpec((TB, D_out), lambda b: (b, 0)),
        ),
        compiler_params=pltpu.CompilerParams(
            dimension_semantics=("parallel",),
            vmem_limit_bytes=vmem_limit),
        cost_estimate=pl.CostEstimate(
            flops=int(flops),
            transcendentals=int(B_pad),
            bytes_accessed=int(bytes_accessed)),
    )(x_pad, fused["w"], fused["aux"])

    p = out[:B, :n_policy].reshape(B, num_blocks, num_ops)
    v = out[:B, n_policy]
    return p, v


# ----------------------------------------------------------------------------
# Pure-JAX reference (f32) for correctness check
# ----------------------------------------------------------------------------
def reference_forward(params, x, num_blocks, num_ops):
    h = x
    for (w, b) in params["convs"]:
        h = lax.conv_general_dilated(h, w, window_strides=(2,), padding=[(1, 1)],
                                     dimension_numbers=("NCH", "OIH", "NCH"))
        h = jnp.maximum(h + b[None, :, None], 0.0)
    B = h.shape[0]
    hf = h.reshape(B, -1)
    p = hf @ params["wp"].T + params["bp"]
    v = jnp.maximum(hf @ params["wv1"].T + params["bv1"], 0.0)
    v = jnp.tanh(v @ params["wv2"].T + params["bv2"])[:, 0]
    return p.reshape(B, num_blocks, num_ops), v


# ----------------------------------------------------------------------------
if __name__ == "__main__":
    B = 2                 # batch
    num_blocks = 16       # N
    history_len = 4       # T (conv input channels)
    hidden_dim = 32
    num_filters = [8, 16, 32]
    num_ops = 3

    key = jax.random.PRNGKey(0)
    pkey, xkey = jax.random.split(key)
    params = init_params(pkey, num_blocks, history_len, hidden_dim,
                         num_filters, num_ops)

    # One-time setup: expand/pad/fuse parameters (hoisted out of forward path).
    fused = prepare_fused_params(params, num_blocks, history_len, num_ops,
                                 param_dtype=jnp.bfloat16)

    x = jax.random.normal(xkey, (B, history_len, num_blocks), jnp.float32)

    fwd = jax.jit(lambda xx: prune_model_forward(fused, xx, num_blocks, num_ops))
    p_logits, value = fwd(x)
    p_logits = jax.block_until_ready(p_logits)
    value = jax.block_until_ready(value)

    p_ref, v_ref = reference_forward(params, x, num_blocks, num_ops)

    assert p_logits.shape == (B, num_blocks, num_ops)
    assert value.shape == (B,)
    # bf16 weights + bf16 activations on the MXU (f32 accumulation) -> looser
    # tolerance than pure f32.
    assert jnp.allclose(p_logits, p_ref, rtol=3e-2, atol=3e-2), \
        float(jnp.max(jnp.abs(p_logits - p_ref)))
    assert jnp.allclose(value, v_ref, rtol=3e-2, atol=3e-2), \
        float(jnp.max(jnp.abs(value - v_ref)))

    print("KERNEL_OK")
</pallas_src>

<mosaic_0001>
module attributes {stable_mosaic.version = 11 : i64} {
  func.func @fused_forward_kernel(%arg0: i32, %arg1: memref<16x128xbf16, #tpu.memory_space<vmem>>, %arg2: memref<4x128x128xbf16, #tpu.memory_space<vmem>>, %arg3: memref<8x128xf32, #tpu.memory_space<vmem>>, %arg4: memref<16x128xf32, #tpu.memory_space<vmem>>) attributes {dimension_semantics = [#tpu.dimension_semantics<parallel>], iteration_bounds = array<i64: 1>, scalar_prefetch = 0 : i64, scratch_operands = 0 : i64, tpu.core_type = #tpu.core_type<tc>, window_params = [{transform_indices = @transform_0, window_bounds = array<i64: 16, 128>}, {pipeline_mode = #tpu.pipeline_mode<synchronous>, transform_indices = @transform_1, window_bounds = array<i64: 4, 128, 128>}, {pipeline_mode = #tpu.pipeline_mode<synchronous>, transform_indices = @transform_2, window_bounds = array<i64: 8, 128>}, {transform_indices = @transform_3, window_bounds = array<i64: 16, 128>}]} {
    %c0 = arith.constant 0 : index
    %c0_0 = arith.constant 0 : index
    %0 = vector.load %arg3[%c0, %c0_0] : memref<8x128xf32, #tpu.memory_space<vmem>>, vector<8x128xf32>
    %c0_1 = arith.constant 0 : index
    %c0_2 = arith.constant 0 : index
    %1 = vector.load %arg1[%c0_1, %c0_2] : memref<16x128xbf16, #tpu.memory_space<vmem>>, vector<16x128xbf16>
    %c0_3 = arith.constant 0 : index
    %c0_4 = arith.constant 0 : index
    %c0_5 = arith.constant 0 : index
    %2 = vector.load %arg2[%c0_3, %c0_4, %c0_5] : memref<4x128x128xbf16, #tpu.memory_space<vmem>>, vector<1x128x128xbf16>
    %3 = vector.shape_cast %2 : vector<1x128x128xbf16> to vector<128x128xbf16>
    %cst = arith.constant dense<0.000000e+00> : vector<16x128xf32>
    %4 = tpu.matmul %1, %3, %cst {dimension_numbers = #tpu.dot_dimension_numbers<[1], [0], [0], [1], [0, 0, 1, 1], [], []>} : vector<16x128xbf16>, vector<128x128xbf16>, vector<16x128xf32> -> vector<16x128xf32>
    %5 = vector.extract_strided_slice %0 {offsets = [0, 0], sizes = [1, 128], strides = [1, 1]} : vector<8x128xf32> to vector<1x128xf32>
    %6 = vector.broadcast %5 : vector<1x128xf32> to vector<16x128xf32>
    %7 = arith.addf %4, %6 : vector<16x128xf32>
    %cst_6 = arith.constant 0.000000e+00 : f32
    %8 = vector.broadcast %cst_6 : f32 to vector<16x128xf32>
    %9 = arith.maximumf %7, %8 : vector<16x128xf32>
    %10 = arith.truncf %9 : vector<16x128xf32> to vector<16x128xbf16>
    %c1 = arith.constant 1 : index
    %c0_7 = arith.constant 0 : index
    %c0_8 = arith.constant 0 : index
    %11 = vector.load %arg2[%c1, %c0_7, %c0_8] : memref<4x128x128xbf16, #tpu.memory_space<vmem>>, vector<1x128x128xbf16>
    %12 = vector.shape_cast %11 : vector<1x128x128xbf16> to vector<128x128xbf16>
    %cst_9 = arith.constant dense<0.000000e+00> : vector<16x128xf32>
    %13 = tpu.matmul %10, %12, %cst_9 {dimension_numbers = #tpu.dot_dimension_numbers<[1], [0], [0], [1], [0, 0, 1, 1], [], []>} : vector<16x128xbf16>, vector<128x128xbf16>, vector<16x128xf32> -> vector<16x128xf32>
    %14 = vector.extract_strided_slice %0 {offsets = [1, 0], sizes = [1, 128], strides = [1, 1]} : vector<8x128xf32> to vector<1x128xf32>
    %15 = vector.broadcast %14 : vector<1x128xf32> to vector<16x128xf32>
    %16 = arith.addf %13, %15 : vector<16x128xf32>
    %cst_10 = arith.constant 0.000000e+00 : f32
    %17 = vector.broadcast %cst_10 : f32 to vector<16x128xf32>
    %18 = arith.maximumf %16, %17 : vector<16x128xf32>
    %19 = arith.truncf %18 : vector<16x128xf32> to vector<16x128xbf16>
    %c2 = arith.constant 2 : index
    %c0_11 = arith.constant 0 : index
    %c0_12 = arith.constant 0 : index
    %20 = vector.load %arg2[%c2, %c0_11, %c0_12] : memref<4x128x128xbf16, #tpu.memory_space<vmem>>, vector<1x128x128xbf16>
    %21 = vector.shape_cast %20 : vector<1x128x128xbf16> to vector<128x128xbf16>
    %cst_13 = arith.constant dense<0.000000e+00> : vector<16x128xf32>
    %22 = tpu.matmul %19, %21, %cst_13 {dimension_numbers = #tpu.dot_dimension_numbers<[1], [0], [0], [1], [0, 0, 1, 1], [], []>} : vector<16x128xbf16>, vector<128x128xbf16>, vector<16x128xf32> -> vector<16x128xf32>
    %23 = vector.extract_strided_slice %0 {offsets = [2, 0], sizes = [1, 128], strides = [1, 1]} : vector<8x128xf32> to vector<1x128xf32>
    %24 = vector.broadcast %23 : vector<1x128xf32> to vector<16x128xf32>
    %25 = arith.addf %22, %24 : vector<16x128xf32>
    %cst_14 = arith.constant 0.000000e+00 : f32
    %26 = vector.broadcast %cst_14 : f32 to vector<16x128xf32>
    %27 = arith.maximumf %25, %26 : vector<16x128xf32>
    %28 = arith.truncf %27 : vector<16x128xf32> to vector<16x128xbf16>
    %c3 = arith.constant 3 : index
    %c0_15 = arith.constant 0 : index
    %c0_16 = arith.constant 0 : index
    %29 = vector.load %arg2[%c3, %c0_15, %c0_16] : memref<4x128x128xbf16, #tpu.memory_space<vmem>>, vector<1x128x128xbf16>
    %30 = vector.shape_cast %29 : vector<1x128x128xbf16> to vector<128x128xbf16>
    %cst_17 = arith.constant dense<0.000000e+00> : vector<16x128xf32>
    %31 = tpu.matmul %28, %30, %cst_17 {dimension_numbers = #tpu.dot_dimension_numbers<[1], [0], [0], [1], [0, 0, 1, 1], [], []>} : vector<16x128xbf16>, vector<128x128xbf16>, vector<16x128xf32> -> vector<16x128xf32>
    %32 = vector.extract_strided_slice %0 {offsets = [3, 0], sizes = [1, 128], strides = [1, 1]} : vector<8x128xf32> to vector<1x128xf32>
    %33 = vector.broadcast %32 : vector<1x128xf32> to vector<16x128xf32>
    %34 = arith.addf %31, %33 : vector<16x128xf32>
    %cst_18 = arith.constant 0.000000e+00 : f32
    %35 = vector.broadcast %cst_18 : f32 to vector<16x128xf32>
    %36 = arith.maximumf %34, %35 : vector<16x128xf32>
    %37 = vector.extract_strided_slice %0 {offsets = [4, 0], sizes = [1, 128], strides = [1, 1]} : vector<8x128xf32> to vector<1x128xf32>
    %38 = vector.broadcast %37 : vector<1x128xf32> to vector<16x128xf32>
    %39 = arith.mulf %36, %38 : vector<16x128xf32>
    %cst_19 = arith.constant dense<0.000000e+00> : vector<16xf32>
    %40 = vector.multi_reduction <add>, %39, %cst_19 [1] : vector<16x128xf32> to vector<16xf32>
    %41 = vector.shape_cast %40 : vector<16xf32> to vector<16x1xf32>
    %42 = vector.extract_strided_slice %0 {offsets = [5, 0], sizes = [1, 1], strides = [1, 1]} : vector<8x128xf32> to vector<1x1xf32>
    %43 = vector.broadcast %42 : vector<1x1xf32> to vector<16x1xf32>
    %44 = arith.addf %41, %43 : vector<16x1xf32>
    %45 = math.tanh %44 : vector<16x1xf32>
    %c0_20 = arith.constant 0 : index
    %c0_21 = arith.constant 0 : index
    %46 = vector.load %arg4[%c0_20, %c0_21] : memref<16x128xf32, #tpu.memory_space<vmem>>, vector<16x128xf32>
    tpu.vector_store %arg4[%c0_20, %c0_21], %34 {strides = array<i32>} : memref<16x128xf32, #tpu.memory_space<vmem>>, vector<16x128xf32>,
    %c0_22 = arith.constant 0 : index
    %c48 = arith.constant 48 : index
    %47 = vector.load %arg4[%c0_22, %c48] : memref<16x128xf32, #tpu.memory_space<vmem>>, vector<16x1xf32>
    tpu.vector_store %arg4[%c0_22, %c48], %45 {strides = array<i32>} : memref<16x128xf32, #tpu.memory_space<vmem>>, vector<16x1xf32>,
    return
  }
  func.func @transform_0(%arg0: i32) -> (i32, i32) {
    %c0_i32 = arith.constant 0 : i32
    %c0_i32_0 = arith.constant 0 : i32
    return %arg0, %c0_i32 : i32, i32
  }
  func.func @transform_1(%arg0: i32) -> (i32, i32, i32) {
    %c0_i32 = arith.constant 0 : i32
    %c0_i32_0 = arith.constant 0 : i32
    %c0_i32_1 = arith.constant 0 : i32
    %c0_i32_2 = arith.constant 0 : i32
    return %c0_i32, %c0_i32_0, %c0_i32_1 : i32, i32, i32
  }
  func.func @transform_2(%arg0: i32) -> (i32, i32) {
    %c0_i32 = arith.constant 0 : i32
    %c0_i32_0 = arith.constant 0 : i32
    %c0_i32_1 = arith.constant 0 : i32
    return %c0_i32, %c0_i32_0 : i32, i32
  }
  func.func @transform_3(%arg0: i32) -> (i32, i32) {
    %c0_i32 = arith.constant 0 : i32
    %c0_i32_0 = arith.constant 0 : i32
    return %arg0, %c0_i32 : i32, i32
  }
}

</mosaic_0001>

<llo_original>
// kernel: _lambda_.1
$region0: #{_lambda_.1}
  #allocation0 [shape = 'u32[]', space=smem, size = 0x4, offset = 0x4, fixed_abs, tag = 'smem constant byte address 0x4 - core index']
  #allocation1 [shape = 'u32[144,128]{1,0:T(1,128)}', space=vmem, size = 0x12000, scoped, tag = 'internal scratch']
  %s0 = inlined_call_operand.vmem [shape: bf16[16,128], index: 0, kind: input, shape index: {}]
  %s1 = inlined_call_operand.hbm [shape: bf16[4,128,128], index: 1, kind: input, shape index: {}]
  %s2 = inlined_call_operand.vmem [shape: f32[8,128], index: 2, kind: input, shape index: {}]
  %s3 = inlined_call_operand.vmem [shape: f32[16,128], index: 3, kind: output, shape index: {}]
  %s4 = sld [smem:[#allocation0]]
  $region26: #{_lambda_.1} parent=0
    _
  %s6 = ssub.s32 1, %s4
  %s7 = scalar_select 0, %s6, %s4
  $region1: #{_lambda_.1} parent=0
    #allocation2 [shape = 'u8[131072]{0}', space=vmem, size = 0x20000, scoped, tag = 'input window, operand 1, single buffered']
    #allocation3 [shape = 's32[1]{0}', space=sflag, size = 0x4, scoped, tag = 'scoped memory for _lambda_.1']
    %8 = vsyncpa [#allocation3], 0
    // Predicated region
    $region2: #{_lambda_.1} parent=1 // pred_check
      _
    $region3: #{_lambda_.1} parent=1 // pred_check_branch
      %10 = sbr.rel (0) target = $region5
    $region4: #{_lambda_.1} parent=1 // pred_region
      _
    $region5: #{_lambda_.1} parent=1 // pred_fallthru
      _
    // Predicated region
    $region6: #{_lambda_.1} parent=1 // pred_check
      _
    $region7: #{_lambda_.1} parent=1 // pred_check_branch
      %12 = sbr.rel (0) target = $region9
    $region8: #{_lambda_.1} parent=1 // pred_region
      %s14 = ssub.s32 4096, 4096
      %15 = vsyncadd [#allocation3], %s14
      %s16 = sshll.u32 [#allocation2], 4
      %s17 = int_to_ptr.vmem [resolvable:$true] %s16
      %22 = dma.hbm_to_vmem [thread:$0]  %s1, 4096, %s17, [#allocation3], 64, 64, 4
    $region9: #{_lambda_.1} parent=1 // pred_fallthru
      _
    // Predicated region
    $region10: #{_lambda_.1} parent=1 // pred_check
      _
    $region11: #{_lambda_.1} parent=1 // pred_check_branch
      %24 = sbr.rel (0) target = $region13
    $region12: #{_lambda_.1} parent=1 // pred_region
      _
    $region13: #{_lambda_.1} parent=1 // pred_fallthru
      _
    // Predicated region
    $region14: #{_lambda_.1} parent=1 // pred_check
      _
    $region15: #{_lambda_.1} parent=1 // pred_check_branch
      %26 = sbr.rel (0) target = $region17
    $region16: #{_lambda_.1} parent=1 // pred_region
      %27 = dma.done [#allocation3], 4096
    $region17: #{_lambda_.1} parent=1 // pred_fallthru
      _
    %v29 = vld [vmem:[%s2] sm:$0xff]
    %v30 = vld [vmem:[%s0] sm:$0xf]
    %v31 = vld [vmem:[%s0 + $0x4] sm:$0xf]
    %v32 = vld [vmem:[#allocation2] sm:$0xf]
    %v33 = vld [vmem:[#allocation2 + $0x4] sm:$0xf]
    %v34 = vld [vmem:[#allocation2 + $0x8] sm:$0xf]
    %v35 = vld [vmem:[#allocation2 + $0xc] sm:$0xf]
    %v36 = vld [vmem:[#allocation2 + $0x10] sm:$0xf]
    %v37 = vld [vmem:[#allocation2 + $0x14] sm:$0xf]
    %v38 = vld [vmem:[#allocation2 + $0x18] sm:$0xf]
    %v39 = vld [vmem:[#allocation2 + $0x1c] sm:$0xf]
    %v40 = vld [vmem:[#allocation2 + $0x20] sm:$0xf]
    %v41 = vld [vmem:[#allocation2 + $0x24] sm:$0xf]
    %v42 = vld [vmem:[#allocation2 + $0x28] sm:$0xf]
    %v43 = vld [vmem:[#allocation2 + $0x2c] sm:$0xf]
    %v44 = vld [vmem:[#allocation2 + $0x30] sm:$0xf]
    %v45 = vld [vmem:[#allocation2 + $0x34] sm:$0xf]
    %v46 = vld [vmem:[#allocation2 + $0x38] sm:$0xf]
    %v47 = vld [vmem:[#allocation2 + $0x3c] sm:$0xf]
    %v48 = vlaneseq
    %v49 = vshrl.u32 %v48, 7
    %v50 = vsub.s32 0, %v49
    %v51 = vrot.slane %v29, %v50
    %v54 = vunpack.c.l.b16 %v30
    %v55 = vunpack.c.l.b16 %v31
    %v56 = vpack.c.b16 %v55, %v54
    %v74 = vunpack.c.l.b16 %v32
    %v75 = vunpack.c.l.b16 %v33
    %v76 = vunpack.c.l.b16 %v34
    %v77 = vunpack.c.l.b16 %v35
    %v78 = vunpack.c.l.b16 %v36
    %v79 = vunpack.c.l.b16 %v37
    %v80 = vunpack.c.l.b16 %v38
    %v81 = vunpack.c.l.b16 %v39
    %v82 = vunpack.c.l.b16 %v40
    %v83 = vunpack.c.l.b16 %v41
    %v84 = vunpack.c.l.b16 %v42
    %v85 = vunpack.c.l.b16 %v43
    %v86 = vunpack.c.l.b16 %v44
    %v87 = vunpack.c.l.b16 %v45
    %v88 = vunpack.c.l.b16 %v46
    %v89 = vunpack.c.l.b16 %v47
    %v90 = vpack.c.b16 %v75, %v74
    %v91 = vpack.c.b16 %v77, %v76
    %v92 = vpack.c.b16 %v79, %v78
    %v93 = vpack.c.b16 %v81, %v80
    %v94 = vpack.c.b16 %v83, %v82
    %v95 = vpack.c.b16 %v85, %v84
    %v96 = vpack.c.b16 %v87, %v86
    %v97 = vpack.c.b16 %v89, %v88
    %106 = vmatprep.subr.bf16.mxu0 0
    %107 = vmatpush1.bf16.msra.mxu0 %v97
    %108 = vmatprep.subr.bf16.mxu0 0
    %109 = vmatpush1.bf16.msra.mxu0 %v96
    %110 = vmatprep.subr.bf16.mxu0 0
    %111 = vmatpush1.bf16.msra.mxu0 %v95
    %112 = vmatprep.subr.bf16.mxu0 0
    %113 = vmatpush1.bf16.msra.mxu0 %v94
    %114 = vmatprep.subr.bf16.mxu0 0
    %115 = vmatpush1.bf16.msra.mxu0 %v93
    %116 = vmatprep.subr.bf16.mxu0 0
    %117 = vmatpush1.bf16.msra.mxu0 %v92
    %118 = vmatprep.subr.bf16.mxu0 0
    %119 = vmatpush1.bf16.msra.mxu0 %v91
    %120 = vmatprep.subr.bf16.mxu0 0
    %121 = vmatpush1.bf16.msra.mxu0 %v90
    %122 = vmatprep.subr.bf16.mxu0 0
    %123 = vmatpush2.bf16.msra.mxu0 0
    %124 = vmatprep.subr.bf16.mxu0 0
    %125 = vmatpush2.bf16.msra.mxu0 0
    %126 = vmatprep.subr.bf16.mxu0 0
    %127 = vmatpush2.bf16.msra.mxu0 0
    %128 = vmatprep.subr.bf16.mxu0 0
    %129 = vmatpush2.bf16.msra.mxu0 0
    %130 = vmatprep.subr.bf16.mxu0 0
    %131 = vmatpush2.bf16.msra.mxu0 0
    %132 = vmatprep.subr.bf16.mxu0 0
    %133 = vmatpush2.bf16.msra.mxu0 0
    %134 = vmatprep.subr.bf16.mxu0 0
    %135 = vmatpush2.bf16.msra.mxu0 0
    %136 = vmatprep.subr.bf16.mxu0 0
    %137 = vmatpush2.bf16.msra.mxu0 0
    %138 = vmatprep.mubr.bf16.mxu0 0
    %139 = vmatmul.mubr.bf16.gmra.mxu0 %v56
    %v140 = vpop.f32.mrf.mxu0
    %v141 = vadd.f32 %v51, %v140
    %v142 = vpop.f32.mrf.mxu0
    %v143 = vpop.f32.mrf.mxu0
    %v144 = vadd.f32 %v51, %v143
    %v145 = vpop.f32.mrf.mxu0
    %146 = vdwg.mxu0
    %v147 = vmax.f32 %v141, 0.0
    %v148 = vmax.f32 %v144, 0.0
    %v149 = vpack.c.bf16 %v148, %v147
    %s150 = scalar_lea.vmem [#allocation2], 64
    %v151 = vld [vmem:[%s150] sm:$0xf]
    %v152 = vld [vmem:[%s150 + $0x4] sm:$0xf]
    %v153 = vld [vmem:[%s150 + $0x8] sm:$0xf]
    %v154 = vld [vmem:[%s150 + $0xc] sm:$0xf]
    %v155 = vld [vmem:[%s150 + $0x10] sm:$0xf]
    %v156 = vld [vmem:[%s150 + $0x14] sm:$0xf]
    %v157 = vld [vmem:[%s150 + $0x18] sm:$0xf]
    %v158 = vld [vmem:[%s150 + $0x1c] sm:$0xf]
    %v159 = vld [vmem:[%s150 + $0x20] sm:$0xf]
    %v160 = vld [vmem:[%s150 + $0x24] sm:$0xf]
    %v161 = vld [vmem:[%s150 + $0x28] sm:$0xf]
    %v162 = vld [vmem:[%s150 + $0x2c] sm:$0xf]
    %v163 = vld [vmem:[%s150 + $0x30] sm:$0xf]
    %v164 = vld [vmem:[%s150 + $0x34] sm:$0xf]
    %v165 = vld [vmem:[%s150 + $0x38] sm:$0xf]
    %v166 = vld [vmem:[%s150 + $0x3c] sm:$0xf]
    %v167 = vlaneseq
    %v168 = vshrl.u32 %v167, 7
    %v169 = vsub.s32 1, %v168
    %v170 = vrot.slane %v29, %v169
    %v187 = vunpack.c.l.b16 %v151
    %v188 = vunpack.c.l.b16 %v152
    %v189 = vunpack.c.l.b16 %v153
    %v190 = vunpack.c.l.b16 %v154
    %v191 = vunpack.c.l.b16 %v155
    %v192 = vunpack.c.l.b16 %v156
    %v193 = vunpack.c.l.b16 %v157
    %v194 = vunpack.c.l.b16 %v158
    %v195 = vunpack.c.l.b16 %v159
    %v196 = vunpack.c.l.b16 %v160
    %v197 = vunpack.c.l.b16 %v161
    %v198 = vunpack.c.l.b16 %v162
    %v199 = vunpack.c.l.b16 %v163
    %v200 = vunpack.c.l.b16 %v164
    %v201 = vunpack.c.l.b16 %v165
    %v202 = vunpack.c.l.b16 %v166
    %v203 = vpack.c.b16 %v188, %v187
    %v204 = vpack.c.b16 %v190, %v189
    %v205 = vpack.c.b16 %v192, %v191
    %v206 = vpack.c.b16 %v194, %v193
    %v207 = vpack.c.b16 %v196, %v195
    %v208 = vpack.c.b16 %v198, %v197
    %v209 = vpack.c.b16 %v200, %v199
    %v210 = vpack.c.b16 %v202, %v201
    %219 = vmatprep.subr.bf16.mxu0 0
    %220 = vmatpush1.bf16.msra.mxu0 %v210
    %221 = vmatprep.subr.bf16.mxu0 0
    %222 = vmatpush1.bf16.msra.mxu0 %v209
    %223 = vmatprep.subr.bf16.mxu0 0
    %224 = vmatpush1.bf16.msra.mxu0 %v208
    %225 = vmatprep.subr.bf16.mxu0 0
    %226 = vmatpush1.bf16.msra.mxu0 %v207
    %227 = vmatprep.subr.bf16.mxu0 0
    %228 = vmatpush1.bf16.msra.mxu0 %v206
    %229 = vmatprep.subr.bf16.mxu0 0
    %230 = vmatpush1.bf16.msra.mxu0 %v205
    %231 = vmatprep.subr.bf16.mxu0 0
    %232 = vmatpush1.bf16.msra.mxu0 %v204
    %233 = vmatprep.subr.bf16.mxu0 0
    %234 = vmatpush1.bf16.msra.mxu0 %v203
    %235 = vmatprep.subr.bf16.mxu0 0
    %236 = vmatpush2.bf16.msra.mxu0 0
    %237 = vmatprep.subr.bf16.mxu0 0
    %238 = vmatpush2.bf16.msra.mxu0 0
    %239 = vmatprep.subr.bf16.mxu0 0
    %240 = vmatpush2.bf16.msra.mxu0 0
    %241 = vmatprep.subr.bf16.mxu0 0
    %242 = vmatpush2.bf16.msra.mxu0 0
    %243 = vmatprep.subr.bf16.mxu0 0
    %244 = vmatpush2.bf16.msra.mxu0 0
    %245 = vmatprep.subr.bf16.mxu0 0
    %246 = vmatpush2.bf16.msra.mxu0 0
    %247 = vmatprep.subr.bf16.mxu0 0
    %248 = vmatpush2.bf16.msra.mxu0 0
    %249 = vmatprep.subr.bf16.mxu0 0
    %250 = vmatpush2.bf16.msra.mxu0 0
    %251 = vmatprep.mubr.bf16.mxu0 0
    %252 = vmatmul.mubr.bf16.gmra.mxu0 %v149
    %v253 = vpop.f32.mrf.mxu0
    %v254 = vadd.f32 %v170, %v253
    %v255 = vpop.f32.mrf.mxu0
    %v256 = vpop.f32.mrf.mxu0
    %v257 = vadd.f32 %v170, %v256
    %v258 = vpop.f32.mrf.mxu0
    %259 = vdwg.mxu0
    %v260 = vmax.f32 %v254, 0.0
    %v261 = vmax.f32 %v257, 0.0
    %v262 = vpack.c.bf16 %v261, %v260
    %s263 = scalar_lea.vmem [#allocation2], 128
    %v264 = vld [vmem:[%s263] sm:$0xf]
    %v265 = vld [vmem:[%s263 + $0x4] sm:$0xf]
    %v266 = vld [vmem:[%s263 + $0x8] sm:$0xf]
    %v267 = vld [vmem:[%s263 + $0xc] sm:$0xf]
    %v268 = vld [vmem:[%s263 + $0x10] sm:$0xf]
    %v269 = vld [vmem:[%s263 + $0x14] sm:$0xf]
    %v270 = vld [vmem:[%s263 + $0x18] sm:$0xf]
    %v271 = vld [vmem:[%s263 + $0x1c] sm:$0xf]
    %v272 = vld [vmem:[%s263 + $0x20] sm:$0xf]
    %v273 = vld [vmem:[%s263 + $0x24] sm:$0xf]
    %v274 = vld [vmem:[%s263 + $0x28] sm:$0xf]
    %v275 = vld [vmem:[%s263 + $0x2c] sm:$0xf]
    %v276 = vld [vmem:[%s263 + $0x30] sm:$0xf]
    %v277 = vld [vmem:[%s263 + $0x34] sm:$0xf]
    %v278 = vld [vmem:[%s263 + $0x38] sm:$0xf]
    %v279 = vld [vmem:[%s263 + $0x3c] sm:$0xf]
    %v280 = vlaneseq
    %v281 = vshrl.u32 %v280, 7
    %v282 = vsub.s32 2, %v281
    %v283 = vrot.slane %v29, %v282
    %v300 = vunpack.c.l.b16 %v264
    %v301 = vunpack.c.l.b16 %v265
    %v302 = vunpack.c.l.b16 %v266
    %v303 = vunpack.c.l.b16 %v267
    %v304 = vunpack.c.l.b16 %v268
    %v305 = vunpack.c.l.b16 %v269
    %v306 = vunpack.c.l.b16 %v270
    %v307 = vunpack.c.l.b16 %v271
    %v308 = vunpack.c.l.b16 %v272
    %v309 = vunpack.c.l.b16 %v273
    %v310 = vunpack.c.l.b16 %v274
    %v311 = vunpack.c.l.b16 %v275
    %v312 = vunpack.c.l.b16 %v276
    %v313 = vunpack.c.l.b16 %v277
    %v314 = vunpack.c.l.b16 %v278
    %v315 = vunpack.c.l.b16 %v279
    %v316 = vpack.c.b16 %v301, %v300
    %v317 = vpack.c.b16 %v303, %v302
    %v318 = vpack.c.b16 %v305, %v304
    %v319 = vpack.c.b16 %v307, %v306
    %v320 = vpack.c.b16 %v309, %v308
    %v321 = vpack.c.b16 %v311, %v310
    %v322 = vpack.c.b16 %v313, %v312
    %v323 = vpack.c.b16 %v315, %v314
    %332 = vmatprep.subr.bf16.mxu0 0
    %333 = vmatpush1.bf16.msra.mxu0 %v323
    %334 = vmatprep.subr.bf16.mxu0 0
    %335 = vmatpush1.bf16.msra.mxu0 %v322
    %336 = vmatprep.subr.bf16.mxu0 0
    %337 = vmatpush1.bf16.msra.mxu0 %v321
    %338 = vmatprep.subr.bf16.mxu0 0
    %339 = vmatpush1.bf16.msra.mxu0 %v320
    %340 = vmatprep.subr.bf16.mxu0 0
    %341 = vmatpush1.bf16.msra.mxu0 %v319
    %342 = vmatprep.subr.bf16.mxu0 0
    %343 = vmatpush1.bf16.msra.mxu0 %v318
    %344 = vmatprep.subr.bf16.mxu0 0
    %345 = vmatpush1.bf16.msra.mxu0 %v317
    %346 = vmatprep.subr.bf16.mxu0 0
    %347 = vmatpush1.bf16.msra.mxu0 %v316
    %348 = vmatprep.subr.bf16.mxu0 0
    %349 = vmatpush2.bf16.msra.mxu0 0
    %350 = vmatprep.subr.bf16.mxu0 0
    %351 = vmatpush2.bf16.msra.mxu0 0
    %352 = vmatprep.subr.bf16.mxu0 0
    %353 = vmatpush2.bf16.msra.mxu0 0
    %354 = vmatprep.subr.bf16.mxu0 0
    %355 = vmatpush2.bf16.msra.mxu0 0
    %356 = vmatprep.subr.bf16.mxu0 0
    %357 = vmatpush2.bf16.msra.mxu0 0
    %358 = vmatprep.subr.bf16.mxu0 0
    %359 = vmatpush2.bf16.msra.mxu0 0
    %360 = vmatprep.subr.bf16.mxu0 0
    %361 = vmatpush2.bf16.msra.mxu0 0
    %362 = vmatprep.subr.bf16.mxu0 0
    %363 = vmatpush2.bf16.msra.mxu0 0
    %364 = vmatprep.mubr.bf16.mxu0 0
    %365 = vmatmul.mubr.bf16.gmra.mxu0 %v262
    %v366 = vpop.f32.mrf.mxu0
    %v367 = vadd.f32 %v283, %v366
    %v368 = vpop.f32.mrf.mxu0
    %v369 = vpop.f32.mrf.mxu0
    %v370 = vadd.f32 %v283, %v369
    %v371 = vpop.f32.mrf.mxu0
    %372 = vdwg.mxu0
    %v373 = vmax.f32 %v367, 0.0
    %v374 = vmax.f32 %v370, 0.0
    %v375 = vpack.c.bf16 %v374, %v373
    %s376 = scalar_lea.vmem [#allocation2], 192
    %v377 = vld [vmem:[%s376] sm:$0xf]
    %v378 = vld [vmem:[%s376 + $0x4] sm:$0xf]
    %v379 = vld [vmem:[%s376 + $0x8] sm:$0xf]
    %v380 = vld [vmem:[%s376 + $0xc] sm:$0xf]
    %v381 = vld [vmem:[%s376 + $0x10] sm:$0xf]
    %v382 = vld [vmem:[%s376 + $0x14] sm:$0xf]
    %v383 = vld [vmem:[%s376 + $0x18] sm:$0xf]
    %v384 = vld [vmem:[%s376 + $0x1c] sm:$0xf]
    %v385 = vld [vmem:[%s376 + $0x20] sm:$0xf]
    %v386 = vld [vmem:[%s376 + $0x24] sm:$0xf]
    %v387 = vld [vmem:[%s376 + $0x28] sm:$0xf]
    %v388 = vld [vmem:[%s376 + $0x2c] sm:$0xf]
    %v389 = vld [vmem:[%s376 + $0x30] sm:$0xf]
    %v390 = vld [vmem:[%s376 + $0x34] sm:$0xf]
    %v391 = vld [vmem:[%s376 + $0x38] sm:$0xf]
    %v392 = vld [vmem:[%s376 + $0x3c] sm:$0xf]
    %v393 = vlaneseq
    %v394 = vshrl.u32 %v393, 7
    %v395 = vsub.s32 3, %v394
    %v396 = vrot.slane %v29, %v395
    %v413 = vunpack.c.l.b16 %v377
    %v414 = vunpack.c.l.b16 %v378
    %v415 = vunpack.c.l.b16 %v379
    %v416 = vunpack.c.l.b16 %v380
    %v417 = vunpack.c.l.b16 %v381
    %v418 = vunpack.c.l.b16 %v382
    %v419 = vunpack.c.l.b16 %v383
    %v420 = vunpack.c.l.b16 %v384
    %v421 = vunpack.c.l.b16 %v385
    %v422 = vunpack.c.l.b16 %v386
    %v423 = vunpack.c.l.b16 %v387
    %v424 = vunpack.c.l.b16 %v388
    %v425 = vunpack.c.l.b16 %v389
    %v426 = vunpack.c.l.b16 %v390
    %v427 = vunpack.c.l.b16 %v391
    %v428 = vunpack.c.l.b16 %v392
    %v429 = vpack.c.b16 %v414, %v413
    %v430 = vpack.c.b16 %v416, %v415
    %v431 = vpack.c.b16 %v418, %v417
    %v432 = vpack.c.b16 %v420, %v419
    %v433 = vpack.c.b16 %v422, %v421
    %v434 = vpack.c.b16 %v424, %v423
    %v435 = vpack.c.b16 %v426, %v425
    %v436 = vpack.c.b16 %v428, %v427
    %445 = vmatprep.subr.bf16.mxu0 0
    %446 = vmatpush1.bf16.msra.mxu0 %v436
    %447 = vmatprep.subr.bf16.mxu0 0
    %448 = vmatpush1.bf16.msra.mxu0 %v435
    %449 = vmatprep.subr.bf16.mxu0 0
    %450 = vmatpush1.bf16.msra.mxu0 %v434
    %451 = vmatprep.subr.bf16.mxu0 0
    %452 = vmatpush1.bf16.msra.mxu0 %v433
    %453 = vmatprep.subr.bf16.mxu0 0
    %454 = vmatpush1.bf16.msra.mxu0 %v432
    %455 = vmatprep.subr.bf16.mxu0 0
    %456 = vmatpush1.bf16.msra.mxu0 %v431
    %457 = vmatprep.subr.bf16.mxu0 0
    %458 = vmatpush1.bf16.msra.mxu0 %v430
    %459 = vmatprep.subr.bf16.mxu0 0
    %460 = vmatpush1.bf16.msra.mxu0 %v429
    %461 = vmatprep.subr.bf16.mxu0 0
    %462 = vmatpush2.bf16.msra.mxu0 0
    %463 = vmatprep.subr.bf16.mxu0 0
    %464 = vmatpush2.bf16.msra.mxu0 0
    %465 = vmatprep.subr.bf16.mxu0 0
    %466 = vmatpush2.bf16.msra.mxu0 0
    %467 = vmatprep.subr.bf16.mxu0 0
    %468 = vmatpush2.bf16.msra.mxu0 0
    %469 = vmatprep.subr.bf16.mxu0 0
    %470 = vmatpush2.bf16.msra.mxu0 0
    %471 = vmatprep.subr.bf16.mxu0 0
    %472 = vmatpush2.bf16.msra.mxu0 0
    %473 = vmatprep.subr.bf16.mxu0 0
    %474 = vmatpush2.bf16.msra.mxu0 0
    %475 = vmatprep.subr.bf16.mxu0 0
    %476 = vmatpush2.bf16.msra.mxu0 0
    %477 = vmatprep.mubr.bf16.mxu0 0
    %478 = vmatmul.mubr.bf16.gmra.mxu0 %v375
    %v479 = vpop.f32.mrf.mxu0
    %v480 = vadd.f32 %v396, %v479
    %v481 = vpop.f32.mrf.mxu0
    %v482 = vpop.f32.mrf.mxu0
    %v483 = vadd.f32 %v396, %v482
    %v484 = vpop.f32.mrf.mxu0
    %485 = vdwg.mxu0
    %v486 = vmax.f32 %v480, 0.0
    %v487 = vmax.f32 %v483, 0.0
    %v488 = vlaneseq
    %v489 = vshrl.u32 %v488, 7
    %v490 = vsub.s32 4, %v489
    %v491 = vrot.slane %v29, %v490
    %v492 = vmul.f32 %v486, %v491
    %v493 = vmul.f32 %v487, %v491
    %494 = vadd.xlane.f32.xlu0 %v492
    %v495 = vpop.xlane.xlu0 %494
    %496 = vadd.xlane.f32.xlu0 %v493
    %v497 = vpop.xlane.xlu0 %496
    %v498 = vlaneseq
    %v499 = vshrl.u32 %v498, 7
    %v500 = vsub.s32 5, %v499
    %v501 = vrot.slane %v29, %v500
    %v502 = vadd.f32 %v495, %v501
    %v503 = vadd.f32 %v497, %v501
    %v504 = vtanh.pop %v502
    %v505 = vtanh.pop %v503
    %506 = vst [vmem:[%s3] sm:$0xff] %v480
    %507 = vst [vmem:[%s3 + $0x8] sm:$0xff] %v483
    %510 = vrot.lane.b32.xlu0 %v504, 48
    %v511 = vpop.permute.xlu0 %510
    %512 = vrot.lane.b32.xlu0 %v505, 48
    %v513 = vpop.permute.xlu0 %512
    %vm516 = vcmask 400768
    %517 = vst.msk [vmem:[%s3] sm:$0xff] %vm516, %v511
    %518 = vst.msk [vmem:[%s3 + $0x8] sm:$0xff] %vm516, %v513
    // Predicated region
    $region18: #{_lambda_.1} parent=1 // pred_check
      _
    $region19: #{_lambda_.1} parent=1 // pred_check_branch
      %520 = sbr.rel (0) target = $region21
    $region20: #{_lambda_.1} parent=1 // pred_region
      _
    $region21: #{_lambda_.1} parent=1 // pred_fallthru
      _
    // Predicated region
    $region22: #{_lambda_.1} parent=1 // pred_check
      _
    $region23: #{_lambda_.1} parent=1 // pred_check_branch
      %522 = sbr.rel (0) target = $region25
    $region24: #{_lambda_.1} parent=1 // pred_region
      _
    $region25: #{_lambda_.1} parent=1 // pred_fallthru
      _
    %523 = vsyncpa [#allocation3], 1

</llo_original>
